<compile_context>
chip_gen: v5e
topology: v5e:2x2
jax: 0.10.0
libtpu: 0.0.40
codegen_flags: <defaults>
</compile_context>

<pallas_src>
import jax
import jax.numpy as jnp
from jax.experimental import pallas as pl
from jax.experimental.pallas import tpu as pltpu


def _make_mlp_kernel_T(num_linear):
    """Fused MLP kernel in transposed (features-on-sublanes, batch-on-lanes) layout.

    Ref order: xT_ref, (w_ref, b_ref) * num_linear, oT_ref
      xT_ref : (in_dim, batch_tile)
      w_ref  : (out_dim_l, in_dim_l)   -- PyTorch weight layout
      b_ref  : (out_dim_l, 1)
      oT_ref : (out_dim, batch_tile)
    ReLU after every layer except the last (matches nn.Module.forward).
    """

    def kernel(*refs):
        xT_ref = refs[0]
        oT_ref = refs[-1]
        param_refs = refs[1:-1]

        h = xT_ref[...].astype(jnp.float32)                 # (in, bt)
        for li in range(num_linear):
            w_ref = param_refs[2 * li]                      # (out_l, in_l)
            b_ref = param_refs[2 * li + 1]                  # (out_l, 1)
            h = (
                jnp.dot(w_ref[...], h, preferred_element_type=jnp.float32)
                + b_ref[...]
            )
            if li < num_linear - 1:
                h = jnp.maximum(h, 0.0)                     # F.relu
        oT_ref[...] = h.astype(oT_ref.dtype)

    return kernel


def _pick_batch_tile(b_padded, requested):
    """Choose a lane-dense batch tile (multiple of 128) that divides b_padded."""
    if requested is not None:
        requested = int(requested)
        if requested >= b_padded:
            return b_padded
        if requested % 128 == 0 and b_padded % requested == 0:
            return requested
    # Prefer ~1k-row tiles (>= ~85% of HBM roofline per measurements),
    # fall back to smaller lane-multiples, else whole (padded) batch.
    for t in (1024, 2048, 4096, 512, 256, 128):
        if t <= b_padded and b_padded % t == 0:
            return t
    return b_padded


def predict_net_forward(x, weights, biases, *, batch_tile=None):
    """Fused MLP forward, equivalent to PyTorch `predict_net.forward`.

    x       : (B, input_dim) float32
    weights : list of (out_dim_l, in_dim_l) float32 arrays (PyTorch layout)
    biases  : list of (out_dim_l,) float32 arrays
    returns : (B, output_dim) float32
    """
    B, in_dim = x.shape
    num_linear = len(weights)
    out_dim = weights[-1].shape[0]

    # Pad batch to a multiple of 128 so batch-on-lanes blocks are lane-dense
    # and satisfy the 128-lane divisibility constraint; pad rows are dropped.
    b_padded = ((B + 127) // 128) * 128
    if b_padded != B:
        x = jnp.pad(x, ((0, b_padded - B), (0, 0)))
    xT = x.T.astype(jnp.float32)                            # (in_dim, b_padded)

    bt = _pick_batch_tile(b_padded, batch_tile)
    grid = (b_padded // bt,)

    biases2d = [b.reshape(-1, 1).astype(jnp.float32) for b in biases]
    weights = [w.astype(jnp.float32) for w in weights]

    kernel = _make_mlp_kernel_T(num_linear)

    # x / out tiled over the batch (lane) axis; weights & biases fully
    # resident and single-buffered (constant index_map -> no 2nd buffer).
    in_specs = [pl.BlockSpec((in_dim, bt), lambda i: (0, i))]
    for w, b2 in zip(weights, biases2d):
        in_specs.append(
            pl.BlockSpec(w.shape, lambda i: (0, 0), pipeline_mode=pl.Buffered(1))
        )
        in_specs.append(
            pl.BlockSpec(b2.shape, lambda i: (0, 0), pipeline_mode=pl.Buffered(1))
        )
    out_spec = pl.BlockSpec((out_dim, bt), lambda i: (0, i))

    # Explicit VMEM budget: 2x-buffered x/out tiles + resident params +
    # per-layer intermediates, with headroom; clamped below v7x's 64 MiB
    # physical VMEM so larger tiles never OOM on that generation.
    itemsize = 4
    dims = [in_dim] + [w.shape[0] for w in weights]
    act_bytes = 2 * (in_dim + out_dim) * bt * itemsize
    param_bytes = sum(w.size + b.size for w, b in zip(weights, biases2d)) * itemsize
    inter_bytes = 2 * max(dims) * bt * itemsize
    vmem_limit = int(
        min(64 * 1024 * 1024,
            max(16 * 1024 * 1024, 2 * (act_bytes + param_bytes + inter_bytes)))
    )

    fn = pl.pallas_call(
        kernel,
        out_shape=jax.ShapeDtypeStruct((out_dim, b_padded), jnp.float32),
        grid_spec=pltpu.PrefetchScalarGridSpec(
            num_scalar_prefetch=0,
            grid=grid,
            in_specs=in_specs,
            out_specs=out_spec,
        ),
        compiler_params=pltpu.CompilerParams(
            dimension_semantics=("parallel",),   # shard batch tiles across TCs
            vmem_limit_bytes=vmem_limit,
        ),
    )

    args = [xT]
    for w, b2 in zip(weights, biases2d):
        args.append(w)
        args.append(b2)
    oT = fn(*args)                               # (out_dim, b_padded)
    return oT.T[:B]                              # (B, out_dim)


def init_predict_net_params(key, input_dim, output_dim, hidden_size):
    """Parameter init mirroring the PyTorch module shapes.

    layers[0]: Linear(input_dim, hidden_size[0]*2)
    layers[i]: Linear(hidden_size[i-1]*2, hidden_size[i]*2)
    last_fc  : Linear(hidden_size[-1]*2, output_dim)

    Weights returned in PyTorch layout (out_dim, in_dim);
    uniform(-1/sqrt(fan_in), 1/sqrt(fan_in)) like torch.nn.Linear.
    """
    dims = [input_dim] + [h * 2 for h in hidden_size] + [output_dim]
    weights, biases = [], []
    for i in range(len(dims) - 1):
        fan_in, fan_out = dims[i], dims[i + 1]
        key, kw, kb = jax.random.split(key, 3)
        bound = 1.0 / jnp.sqrt(fan_in)
        w = jax.random.uniform(
            kw, (fan_out, fan_in), jnp.float32, minval=-bound, maxval=bound
        )
        b = jax.random.uniform(
            kb, (fan_out,), jnp.float32, minval=-bound, maxval=bound
        )
        weights.append(w)
        biases.append(b)
    return weights, biases


def predict_net_reference(x, weights, biases):
    """Plain-JAX reference of the same forward pass (for validation)."""
    h = x
    n = len(weights)
    for i, (w, b) in enumerate(zip(weights, biases)):
        h = h @ w.T + b
        if i < n - 1:
            h = jnp.maximum(h, 0.0)
    return h


if __name__ == "__main__":
    # args.hidden_size = "16 16"  ->  hidden layer widths [32, 32]
    hidden_size = [16, 16]
    input_dim = 16
    output_dim = 8
    batch = 256          # small demo; padded batch stays 256
    batch_tile = 128     # grid=(2,) -> exercises pipelining + both TCs on v7x

    key = jax.random.PRNGKey(0)
    key, kx = jax.random.split(key)
    x = jax.random.normal(kx, (batch, input_dim), dtype=jnp.float32)

    weights, biases = init_predict_net_params(
        key, input_dim, output_dim, hidden_size
    )

    y = predict_net_forward(x, weights, biases, batch_tile=batch_tile)
    y = jax.block_until_ready(y)

    y_ref = predict_net_reference(x, weights, biases)
    assert y.shape == (batch, output_dim)
    assert jnp.allclose(y, y_ref, atol=1e-5, rtol=1e-5)

    print("KERNEL_OK")
</pallas_src>

<mosaic_0001>
module attributes {stable_mosaic.version = 11 : i64} {
  func.func @kernel(%arg0: i32, %arg1: memref<16x128xf32, #tpu.memory_space<vmem>>, %arg2: memref<32x16xf32, #tpu.memory_space<vmem>>, %arg3: memref<32x1xf32, #tpu.memory_space<vmem>>, %arg4: memref<32x32xf32, #tpu.memory_space<vmem>>, %arg5: memref<32x1xf32, #tpu.memory_space<vmem>>, %arg6: memref<8x32xf32, #tpu.memory_space<vmem>>, %arg7: memref<8x1xf32, #tpu.memory_space<vmem>>, %arg8: memref<8x128xf32, #tpu.memory_space<vmem>>) attributes {dimension_semantics = [#tpu.dimension_semantics<parallel>], iteration_bounds = array<i64: 2>, scalar_prefetch = 0 : i64, scratch_operands = 0 : i64, tpu.core_type = #tpu.core_type<tc>, window_params = [{transform_indices = @transform_0, window_bounds = array<i64: 16, 128>}, {pipeline_mode = #tpu.pipeline_mode<synchronous>, transform_indices = @transform_1, window_bounds = array<i64: 32, 16>}, {pipeline_mode = #tpu.pipeline_mode<synchronous>, transform_indices = @transform_2, window_bounds = array<i64: 32, 1>}, {pipeline_mode = #tpu.pipeline_mode<synchronous>, transform_indices = @transform_3, window_bounds = array<i64: 32, 32>}, {pipeline_mode = #tpu.pipeline_mode<synchronous>, transform_indices = @transform_4, window_bounds = array<i64: 32, 1>}, {pipeline_mode = #tpu.pipeline_mode<synchronous>, transform_indices = @transform_5, window_bounds = array<i64: 8, 32>}, {pipeline_mode = #tpu.pipeline_mode<synchronous>, transform_indices = @transform_6, window_bounds = array<i64: 8, 1>}, {transform_indices = @transform_7, window_bounds = array<i64: 8, 128>}]} {
    %c0 = arith.constant 0 : index
    %c0_0 = arith.constant 0 : index
    %0 = vector.load %arg1[%c0, %c0_0] : memref<16x128xf32, #tpu.memory_space<vmem>>, vector<16x128xf32>
    %c0_1 = arith.constant 0 : index
    %c0_2 = arith.constant 0 : index
    %1 = vector.load %arg2[%c0_1, %c0_2] : memref<32x16xf32, #tpu.memory_space<vmem>>, vector<32x16xf32>
    %cst = arith.constant dense<0.000000e+00> : vector<32x128xf32>
    %2 = tpu.matmul %1, %0, %cst {dimension_numbers = #tpu.dot_dimension_numbers<[1], [0], [0], [1], [0, 0, 1, 1], [], []>} : vector<32x16xf32>, vector<16x128xf32>, vector<32x128xf32> -> vector<32x128xf32>
    %c0_3 = arith.constant 0 : index
    %c0_4 = arith.constant 0 : index
    %3 = vector.load %arg3[%c0_3, %c0_4] : memref<32x1xf32, #tpu.memory_space<vmem>>, vector<32x1xf32>
    %4 = vector.broadcast %3 : vector<32x1xf32> to vector<32x128xf32>
    %5 = arith.addf %2, %4 : vector<32x128xf32>
    %cst_5 = arith.constant 0.000000e+00 : f32
    %6 = vector.broadcast %cst_5 : f32 to vector<32x128xf32>
    %7 = arith.maximumf %5, %6 : vector<32x128xf32>
    %c0_6 = arith.constant 0 : index
    %c0_7 = arith.constant 0 : index
    %8 = vector.load %arg4[%c0_6, %c0_7] : memref<32x32xf32, #tpu.memory_space<vmem>>, vector<32x32xf32>
    %cst_8 = arith.constant dense<0.000000e+00> : vector<32x128xf32>
    %9 = tpu.matmul %8, %7, %cst_8 {dimension_numbers = #tpu.dot_dimension_numbers<[1], [0], [0], [1], [0, 0, 1, 1], [], []>} : vector<32x32xf32>, vector<32x128xf32>, vector<32x128xf32> -> vector<32x128xf32>
    %c0_9 = arith.constant 0 : index
    %c0_10 = arith.constant 0 : index
    %10 = vector.load %arg5[%c0_9, %c0_10] : memref<32x1xf32, #tpu.memory_space<vmem>>, vector<32x1xf32>
    %11 = vector.broadcast %10 : vector<32x1xf32> to vector<32x128xf32>
    %12 = arith.addf %9, %11 : vector<32x128xf32>
    %cst_11 = arith.constant 0.000000e+00 : f32
    %13 = vector.broadcast %cst_11 : f32 to vector<32x128xf32>
    %14 = arith.maximumf %12, %13 : vector<32x128xf32>
    %c0_12 = arith.constant 0 : index
    %c0_13 = arith.constant 0 : index
    %15 = vector.load %arg6[%c0_12, %c0_13] : memref<8x32xf32, #tpu.memory_space<vmem>>, vector<8x32xf32>
    %cst_14 = arith.constant dense<0.000000e+00> : vector<8x128xf32>
    %16 = tpu.matmul %15, %14, %cst_14 {dimension_numbers = #tpu.dot_dimension_numbers<[1], [0], [0], [1], [0, 0, 1, 1], [], []>} : vector<8x32xf32>, vector<32x128xf32>, vector<8x128xf32> -> vector<8x128xf32>
    %c0_15 = arith.constant 0 : index
    %c0_16 = arith.constant 0 : index
    %17 = vector.load %arg7[%c0_15, %c0_16] : memref<8x1xf32, #tpu.memory_space<vmem>>, vector<8x1xf32>
    %18 = vector.broadcast %17 : vector<8x1xf32> to vector<8x128xf32>
    %19 = arith.addf %16, %18 : vector<8x128xf32>
    %c0_17 = arith.constant 0 : index
    %c0_18 = arith.constant 0 : index
    %20 = vector.load %arg8[%c0_17, %c0_18] : memref<8x128xf32, #tpu.memory_space<vmem>>, vector<8x128xf32>
    tpu.vector_store %arg8[%c0_17, %c0_18], %19 {strides = array<i32>} : memref<8x128xf32, #tpu.memory_space<vmem>>, vector<8x128xf32>,
    return
  }
  func.func @transform_0(%arg0: i32) -> (i32, i32) {
    %c0_i32 = arith.constant 0 : i32
    %c0_i32_0 = arith.constant 0 : i32
    return %c0_i32, %arg0 : i32, i32
  }
  func.func @transform_1(%arg0: i32) -> (i32, i32) {
    %c0_i32 = arith.constant 0 : i32
    %c0_i32_0 = arith.constant 0 : i32
    %c0_i32_1 = arith.constant 0 : i32
    return %c0_i32, %c0_i32_0 : i32, i32
  }
  func.func @transform_2(%arg0: i32) -> (i32, i32) {
    %c0_i32 = arith.constant 0 : i32
    %c0_i32_0 = arith.constant 0 : i32
    %c0_i32_1 = arith.constant 0 : i32
    return %c0_i32, %c0_i32_0 : i32, i32
  }
  func.func @transform_3(%arg0: i32) -> (i32, i32) {
    %c0_i32 = arith.constant 0 : i32
    %c0_i32_0 = arith.constant 0 : i32
    %c0_i32_1 = arith.constant 0 : i32
    return %c0_i32, %c0_i32_0 : i32, i32
  }
  func.func @transform_4(%arg0: i32) -> (i32, i32) {
    %c0_i32 = arith.constant 0 : i32
    %c0_i32_0 = arith.constant 0 : i32
    %c0_i32_1 = arith.constant 0 : i32
    return %c0_i32, %c0_i32_0 : i32, i32
  }
  func.func @transform_5(%arg0: i32) -> (i32, i32) {
    %c0_i32 = arith.constant 0 : i32
    %c0_i32_0 = arith.constant 0 : i32
    %c0_i32_1 = arith.constant 0 : i32
    return %c0_i32, %c0_i32_0 : i32, i32
  }
  func.func @transform_6(%arg0: i32) -> (i32, i32) {
    %c0_i32 = arith.constant 0 : i32
    %c0_i32_0 = arith.constant 0 : i32
    %c0_i32_1 = arith.constant 0 : i32
    return %c0_i32, %c0_i32_0 : i32, i32
  }
  func.func @transform_7(%arg0: i32) -> (i32, i32) {
    %c0_i32 = arith.constant 0 : i32
    %c0_i32_0 = arith.constant 0 : i32
    return %c0_i32, %arg0 : i32, i32
  }
}

</mosaic_0001>

<llo_original>
// kernel: tpu_custom_call.1
$region0: #{tpu_custom_call.1}
  #allocation0 [shape = 'u32[]', space=smem, size = 0x4, offset = 0x4, fixed_abs, tag = 'smem constant byte address 0x4 - core index']
  #allocation1 [shape = 'u32[72,128]{1,0:T(1,128)}', space=vmem, size = 0x9000, scoped, tag = 'internal scratch']
  %s0 = inlined_call_operand.vmem [shape: f32[16,256], index: 0, kind: input, shape index: {}]
  %s1 = inlined_call_operand.vmem [shape: f32[32,16], index: 1, kind: input, shape index: {}]
  %s2 = inlined_call_operand.vmem [shape: f32[32,1], index: 2, kind: input, shape index: {}]
  %s3 = inlined_call_operand.vmem [shape: f32[32,32], index: 3, kind: input, shape index: {}]
  %s4 = inlined_call_operand.vmem [shape: f32[32,1], index: 4, kind: input, shape index: {}]
  %s5 = inlined_call_operand.vmem [shape: f32[8,32], index: 5, kind: input, shape index: {}]
  %s6 = inlined_call_operand.vmem [shape: f32[8,1], index: 6, kind: input, shape index: {}]
  %s7 = inlined_call_operand.hbm [shape: f32[8,256], index: 7, kind: output, shape index: {}]
  %s8 = sld [smem:[#allocation0]]
  $region99: #{tpu_custom_call.1} parent=0
    _
  %s10 = ssub.s32 1, %s8
  %s11 = scalar_select 0, %s10, %s8
  $region1: #{tpu_custom_call.1} parent=0
    #allocation2 [shape = 'u8[16384]{0}', space=vmem, size = 0x4000, scoped, tag = 'input window, operand 0']
    #allocation3 [shape = 'u8[8192]{0}', space=vmem, size = 0x2000, scoped, tag = 'output window, operand 0']
    #allocation4 [shape = 's32[2]{0}', space=sflag, size = 0x8, scoped, tag = 'scoped memory for tpu_custom_call.1']
    %12 = vsyncpa [#allocation4], 0
    %s13 = scalar_lea.sflag [#allocation4], 1
    %14 = vsyncpa %s13, 0
    loop: start=0, step=1, limit=4
    $region2: #{tpu_custom_call.1} parent=1 // loop_pre_header
      _
    $region3: #{tpu_custom_call.1} parent=1 // loop_header
      %s16 = sphi 0, %s20
      %p17 = scmp.ge.s32.totalorder %s16, 4
      %s26 = sphi 0, %s28
      %s29 = sphi 0, %s26
      %s30 = sphi 0, %s29
      %s46 = sphi 0, %s30
      %s50 = sphi 0, %s50
      %s52 = sphi 0, %s50
      %s53 = sphi 0, %s52
      %s67 = sphi 0, %s53
      %s71 = sphi 0, %s71
      %s73 = sphi 0, %s71
      %s74 = sphi 0, %s73
      %s88 = sphi 0, %s74
      %s92 = sphi 0, %s92
      %s94 = sphi 0, %s92
      %s95 = sphi 0, %s94
      %s109 = sphi 0, %s95
      %s113 = sphi 0, %s113
      %s115 = sphi 0, %s113
      %s116 = sphi 0, %s115
      %s130 = sphi 0, %s116
      %s134 = sphi 0, %s134
      %s136 = sphi 0, %s134
      %s137 = sphi 0, %s136
      %s151 = sphi 0, %s137
      %s155 = sphi 0, %s155
      %s157 = sphi 0, %s155
      %s158 = sphi 0, %s157
      %s172 = sphi 0, %s158
      %s178 = sphi 0, %s180
      %s181 = sphi 0, %s178
      %s182 = sphi 0, %s181
      %s198 = sphi 0, %s182
    $region4: #{tpu_custom_call.1} parent=1 // loop_header_branch
      %19 = sbr.rel (%p17) target = $region8
    $region5: #{tpu_custom_call.1} parent=1 // loop_body
      %s21 = ssub.s32 %s16, 1
      %s22 = ssub.s32 %s16, 2
      %s23 = sadd.s32 %s16, 1
      %s24 = ssub.s32 %s16, %s23
      %p25 = scmp.eq.s32.totalorder %s24, 0
      %s27 = sadd.s32 %s26, 1
      %s28 = scalar_select %p25, %s26, %s27
      %p31 = pneg %p25
      %p32 = scmp.eq.s32.totalorder %s16, 1
      %p33 = por %p31, %p32
      %p34 = scmp.ne.s32.totalorder %s26, %s29
      %p35 = scmp.eq.s32.totalorder %s16, 0
      %p36 = por %p34, %p35
      %p37 = scmp.ne.s32.totalorder %s26, %s29
      %p38 = scmp.eq.s32.totalorder %s21, 1
      %p39 = por %p37, %p38
      %p40 = scmp.ne.s32.totalorder %s29, %s30
      %p41 = scmp.eq.s32.totalorder %s21, 0
      %p42 = por %p40, %p41
      %p43 = scmp.ne.s32.totalorder %s29, %s30
      %p44 = scmp.eq.s32.totalorder %s22, 1
      %p45 = por %p43, %p44
      %p47 = scmp.ne.s32.totalorder %s30, %s46
      %p48 = scmp.eq.s32.totalorder %s22, 0
      %p49 = por %p47, %p48
      %s51 = sadd.s32 %s50, 1
      %p54 = scmp.eq.s32.totalorder %s16, 1
      %p55 = scmp.ne.s32.totalorder %s50, %s52
      %p56 = scmp.eq.s32.totalorder %s16, 0
      %p57 = por %p55, %p56
      %p58 = scmp.ne.s32.totalorder %s50, %s52
      %p59 = scmp.eq.s32.totalorder %s21, 1
      %p60 = por %p58, %p59
      %p61 = scmp.ne.s32.totalorder %s52, %s53
      %p62 = scmp.eq.s32.totalorder %s21, 0
      %p63 = por %p61, %p62
      %p64 = scmp.ne.s32.totalorder %s52, %s53
      %p65 = scmp.eq.s32.totalorder %s22, 1
      %p66 = por %p64, %p65
      %p68 = scmp.ne.s32.totalorder %s53, %s67
      %p69 = scmp.eq.s32.totalorder %s22, 0
      %p70 = por %p68, %p69
      %s72 = sadd.s32 %s71, 1
      %p75 = scmp.eq.s32.totalorder %s16, 1
      %p76 = scmp.ne.s32.totalorder %s71, %s73
      %p77 = scmp.eq.s32.totalorder %s16, 0
      %p78 = por %p76, %p77
      %p79 = scmp.ne.s32.totalorder %s71, %s73
      %p80 = scmp.eq.s32.totalorder %s21, 1
      %p81 = por %p79, %p80
      %p82 = scmp.ne.s32.totalorder %s73, %s74
      %p83 = scmp.eq.s32.totalorder %s21, 0
      %p84 = por %p82, %p83
      %p85 = scmp.ne.s32.totalorder %s73, %s74
      %p86 = scmp.eq.s32.totalorder %s22, 1
      %p87 = por %p85, %p86
      %p89 = scmp.ne.s32.totalorder %s74, %s88
      %p90 = scmp.eq.s32.totalorder %s22, 0
      %p91 = por %p89, %p90
      %s93 = sadd.s32 %s92, 1
      %p96 = scmp.eq.s32.totalorder %s16, 1
      %p97 = scmp.ne.s32.totalorder %s92, %s94
      %p98 = scmp.eq.s32.totalorder %s16, 0
      %p99 = por %p97, %p98
      %p100 = scmp.ne.s32.totalorder %s92, %s94
      %p101 = scmp.eq.s32.totalorder %s21, 1
      %p102 = por %p100, %p101
      %p103 = scmp.ne.s32.totalorder %s94, %s95
      %p104 = scmp.eq.s32.totalorder %s21, 0
      %p105 = por %p103, %p104
      %p106 = scmp.ne.s32.totalorder %s94, %s95
      %p107 = scmp.eq.s32.totalorder %s22, 1
      %p108 = por %p106, %p107
      %p110 = scmp.ne.s32.totalorder %s95, %s109
      %p111 = scmp.eq.s32.totalorder %s22, 0
      %p112 = por %p110, %p111
      %s114 = sadd.s32 %s113, 1
      %p117 = scmp.eq.s32.totalorder %s16, 1
      %p118 = scmp.ne.s32.totalorder %s113, %s115
      %p119 = scmp.eq.s32.totalorder %s16, 0
      %p120 = por %p118, %p119
      %p121 = scmp.ne.s32.totalorder %s113, %s115
      %p122 = scmp.eq.s32.totalorder %s21, 1
      %p123 = por %p121, %p122
      %p124 = scmp.ne.s32.totalorder %s115, %s116
      %p125 = scmp.eq.s32.totalorder %s21, 0
      %p126 = por %p124, %p125
      %p127 = scmp.ne.s32.totalorder %s115, %s116
      %p128 = scmp.eq.s32.totalorder %s22, 1
      %p129 = por %p127, %p128
      %p131 = scmp.ne.s32.totalorder %s116, %s130
      %p132 = scmp.eq.s32.totalorder %s22, 0
      %p133 = por %p131, %p132
      %s135 = sadd.s32 %s134, 1
      %p138 = scmp.eq.s32.totalorder %s16, 1
      %p139 = scmp.ne.s32.totalorder %s134, %s136
      %p140 = scmp.eq.s32.totalorder %s16, 0
      %p141 = por %p139, %p140
      %p142 = scmp.ne.s32.totalorder %s134, %s136
      %p143 = scmp.eq.s32.totalorder %s21, 1
      %p144 = por %p142, %p143
      %p145 = scmp.ne.s32.totalorder %s136, %s137
      %p146 = scmp.eq.s32.totalorder %s21, 0
      %p147 = por %p145, %p146
      %p148 = scmp.ne.s32.totalorder %s136, %s137
      %p149 = scmp.eq.s32.totalorder %s22, 1
      %p150 = por %p148, %p149
      %p152 = scmp.ne.s32.totalorder %s137, %s151
      %p153 = scmp.eq.s32.totalorder %s22, 0
      %p154 = por %p152, %p153
      %s156 = sadd.s32 %s155, 1
      %p159 = scmp.eq.s32.totalorder %s16, 1
      %p160 = scmp.ne.s32.totalorder %s155, %s157
      %p161 = scmp.eq.s32.totalorder %s16, 0
      %p162 = por %p160, %p161
      %p163 = scmp.ne.s32.totalorder %s155, %s157
      %p164 = scmp.eq.s32.totalorder %s21, 1
      %p165 = por %p163, %p164
      %p166 = scmp.ne.s32.totalorder %s157, %s158
      %p167 = scmp.eq.s32.totalorder %s21, 0
      %p168 = por %p166, %p167
      %p169 = scmp.ne.s32.totalorder %s157, %s158
      %p170 = scmp.eq.s32.totalorder %s22, 1
      %p171 = por %p169, %p170
      %p173 = scmp.ne.s32.totalorder %s158, %s172
      %p174 = scmp.eq.s32.totalorder %s22, 0
      %p175 = por %p173, %p174
      %s176 = ssub.s32 %s16, %s23
      %p177 = scmp.eq.s32.totalorder %s176, 0
      %s179 = sadd.s32 %s178, 1
      %s180 = scalar_select %p177, %s178, %s179
      %p183 = pneg %p177
      %p184 = scmp.eq.s32.totalorder %s16, 1
      %p185 = por %p183, %p184
      %p186 = scmp.ne.s32.totalorder %s178, %s181
      %p187 = scmp.eq.s32.totalorder %s16, 0
      %p188 = por %p186, %p187
      %p189 = scmp.ne.s32.totalorder %s178, %s181
      %p190 = scmp.eq.s32.totalorder %s21, 1
      %p191 = por %p189, %p190
      %p192 = scmp.ne.s32.totalorder %s181, %s182
      %p193 = scmp.eq.s32.totalorder %s21, 0
      %p194 = por %p192, %p193
      %p195 = scmp.ne.s32.totalorder %s181, %s182
      %p196 = scmp.eq.s32.totalorder %s22, 1
      %p197 = por %p195, %p196
      %p199 = scmp.ne.s32.totalorder %s182, %s198
      %p200 = scmp.eq.s32.totalorder %s22, 0
      %p201 = por %p199, %p200
      %p202 = scmp.le.s32.totalorder 1, %s16
      %p203 = scmp.lt.s32.totalorder %s16, 3
      %p204 = pnand %p202, %p203
      %p205 = pneg %p204
      // Predicated region
      $region9: #{tpu_custom_call.1} parent=5 // pred_check
        _
      $region10: #{tpu_custom_call.1} parent=5 // pred_check_branch
        %207 = sbr.rel (%p204) target = $region12
      $region11: #{tpu_custom_call.1} parent=5 // pred_region
        %s208 = ssub.s32 %s16, 1
        // Predicated region
        $region13: #{tpu_custom_call.1} parent=11 // pred_check
          %p209 = pneg %p63
        $region14: #{tpu_custom_call.1} parent=11 // pred_check_branch
          %211 = sbr.rel (%p209) target = $region16
        $region15: #{tpu_custom_call.1} parent=11 // pred_region
          _
        $region16: #{tpu_custom_call.1} parent=11 // pred_fallthru
          _
        // Predicated region
        $region17: #{tpu_custom_call.1} parent=11 // pred_check
          %p212 = pneg %p84
        $region18: #{tpu_custom_call.1} parent=11 // pred_check_branch
          %214 = sbr.rel (%p212) target = $region20
        $region19: #{tpu_custom_call.1} parent=11 // pred_region
          _
        $region20: #{tpu_custom_call.1} parent=11 // pred_fallthru
          _
        // Predicated region
        $region21: #{tpu_custom_call.1} parent=11 // pred_check
          %p215 = pneg %p105
        $region22: #{tpu_custom_call.1} parent=11 // pred_check_branch
          %217 = sbr.rel (%p215) target = $region24
        $region23: #{tpu_custom_call.1} parent=11 // pred_region
          _
        $region24: #{tpu_custom_call.1} parent=11 // pred_fallthru
          _
        // Predicated region
        $region25: #{tpu_custom_call.1} parent=11 // pred_check
          %p218 = pneg %p126
        $region26: #{tpu_custom_call.1} parent=11 // pred_check_branch
          %220 = sbr.rel (%p218) target = $region28
        $region27: #{tpu_custom_call.1} parent=11 // pred_region
          _
        $region28: #{tpu_custom_call.1} parent=11 // pred_fallthru
          _
        // Predicated region
        $region29: #{tpu_custom_call.1} parent=11 // pred_check
          %p221 = pneg %p147
        $region30: #{tpu_custom_call.1} parent=11 // pred_check_branch
          %223 = sbr.rel (%p221) target = $region32
        $region31: #{tpu_custom_call.1} parent=11 // pred_region
          _
        $region32: #{tpu_custom_call.1} parent=11 // pred_fallthru
          _
        // Predicated region
        $region33: #{tpu_custom_call.1} parent=11 // pred_check
          %p224 = pneg %p168
        $region34: #{tpu_custom_call.1} parent=11 // pred_check_branch
          %226 = sbr.rel (%p224) target = $region36
        $region35: #{tpu_custom_call.1} parent=11 // pred_region
          _
        $region36: #{tpu_custom_call.1} parent=11 // pred_fallthru
          _
      $region12: #{tpu_custom_call.1} parent=5 // pred_fallthru
        _
      %p227 = scmp.lt.s32.totalorder %s16, 2
      // Predicated region
      $region37: #{tpu_custom_call.1} parent=5 // pred_check
        %p228 = pneg %p227
      $region38: #{tpu_custom_call.1} parent=5 // pred_check_branch
        %230 = sbr.rel (%p228) target = $region40
      $region39: #{tpu_custom_call.1} parent=5 // pred_region
        // Predicated region
        $region41: #{tpu_custom_call.1} parent=39 // pred_check
          %p231 = pneg %p36
        $region42: #{tpu_custom_call.1} parent=39 // pred_check_branch
          %233 = sbr.rel (%p231) target = $region44
        $region43: #{tpu_custom_call.1} parent=39 // pred_region
          %s234 = sand.u32 %s26, 1
          %s235 = sand.u32 %s26, 1
          %s236 = smul.addr %s235, 16
          %s237 = scalar_lea.vmem [#allocation2], %s236
          %s238 = smul.addr %s16, 8
          %s239 = scalar_lea.vmem %s0, %s238
          // Predicated region
          $region45: #{tpu_custom_call.1} parent=43 // pred_check
            _
          $region46: #{tpu_custom_call.1} parent=43 // pred_check_branch
            %241 = sbr.rel (0) target = $region48
          $region47: #{tpu_custom_call.1} parent=43 // pred_region
            // Predicated region
            $region49: #{tpu_custom_call.1} parent=47 // pred_check
              _
            $region50: #{tpu_custom_call.1} parent=47 // pred_check_branch
              %243 = sbr.rel (0) target = $region52
            $region51: #{tpu_custom_call.1} parent=47 // pred_region
              // Predicated region
              $region64: #{tpu_custom_call.1} parent=51 // pred_check
                _
              $region65: #{tpu_custom_call.1} parent=51 // pred_check_branch
                %261 = sbr.rel (0) target = $region67
              $region66: #{tpu_custom_call.1} parent=51 // pred_region
                loop: start=0, step=1, limit=1
                $region68: #{tpu_custom_call.1} parent=66 // loop_pre_header
                  _
                $region69: #{tpu_custom_call.1} parent=66 // loop_header
                  %s263 = sphi 0, %s267
                  %p264 = scmp.ge.s32.totalorder %s263, 1
                  %s268 = sphi %s239, %s239
                  %s269 = sphi %s237, %s237
                $region70: #{tpu_custom_call.1} parent=66 // loop_header_branch
                  %266 = sbr.rel (%p264) target = $region74
                $region71: #{tpu_custom_call.1} parent=66 // loop_body
                  %v270 = vld [vmem:[%s268] sm:$0xff]
                  %271 = vst [vmem:[%s269] sm:$0xff] %v270
                  %v272 = vld [vmem:[%s268 + $0x10] sm:$0xff]
                  %273 = vst [vmem:[%s269 + $0x8] sm:$0xff] %v272
                $region72: #{tpu_custom_call.1} parent=66 // loop_footer
                  %s267 = sadd.s32 1, %s263
                $region73: #{tpu_custom_call.1} parent=66 // loop_footer_branch
                  %262 = sbr.rel target = $region69
                $region74: #{tpu_custom_call.1} parent=66 // loop_exit
                  _
              $region67: #{tpu_custom_call.1} parent=51 // pred_fallthru
                _
              // Predicated region
              $region75: #{tpu_custom_call.1} parent=51 // pred_check
                _
              $region76: #{tpu_custom_call.1} parent=51 // pred_check_branch
                %275 = sbr.rel target = $region78
              $region77: #{tpu_custom_call.1} parent=51 // pred_region
                _
              $region78: #{tpu_custom_call.1} parent=51 // pred_fallthru
                _
            $region52: #{tpu_custom_call.1} parent=47 // pred_fallthru
              _
            // Predicated region
            $region53: #{tpu_custom_call.1} parent=47 // pred_check
              _
            $region54: #{tpu_custom_call.1} parent=47 // pred_check_branch
              %245 = sbr.rel target = $region56
            $region55: #{tpu_custom_call.1} parent=47 // pred_region
              %s247 = ssub.s32 256, 1
              loop: start=0, step=1, limit=1
              $region57: #{tpu_custom_call.1} parent=55 // loop_pre_header
                _
              $region58: #{tpu_custom_call.1} parent=55 // loop_header
                %s249 = sphi 0, %s253
                %p250 = scmp.ge.s32.totalorder %s249, 1
                %s254 = sphi %s239, %s239
                %s255 = sphi %s237, %s237
              $region59: #{tpu_custom_call.1} parent=55 // loop_header_branch
                %252 = sbr.rel (%p250) target = $region63
              $region60: #{tpu_custom_call.1} parent=55 // loop_body
                %v256 = vld [vmem:[%s254] sm:%s247]
                %257 = vst [vmem:[%s255] sm:%s247] %v256
                %v258 = vld [vmem:[%s254 + $0x10] sm:%s247]
                %259 = vst [vmem:[%s255 + $0x8] sm:%s247] %v258
              $region61: #{tpu_custom_call.1} parent=55 // loop_footer
                %s253 = sadd.s32 1, %s249
              $region62: #{tpu_custom_call.1} parent=55 // loop_footer_branch
                %248 = sbr.rel target = $region58
              $region63: #{tpu_custom_call.1} parent=55 // loop_exit
                _
            $region56: #{tpu_custom_call.1} parent=47 // pred_fallthru
              _
          $region48: #{tpu_custom_call.1} parent=43 // pred_fallthru
            _
          %276 = vnop
        $region44: #{tpu_custom_call.1} parent=39 // pred_fallthru
          _
      $region40: #{tpu_custom_call.1} parent=5 // pred_fallthru
        _
      %p277 = scmp.le.s32.totalorder 1, %s16
      %p278 = scmp.lt.s32.totalorder %s16, 3
      %p279 = pnand %p277, %p278
      %p280 = pneg %p279
      // Predicated region
      $region79: #{tpu_custom_call.1} parent=5 // pred_check
        _
      $region80: #{tpu_custom_call.1} parent=5 // pred_check_branch
        %282 = sbr.rel (%p279) target = $region82
      $region81: #{tpu_custom_call.1} parent=5 // pred_region
        %s283 = ssub.s32 %s16, 1
        %s284 = sand.u32 %s29, 1
        %s285 = sand.u32 %s29, 1
        %s286 = smul.addr %s285, 16
        %s287 = scalar_lea.vmem [#allocation2], %s286
        // Predicated region
        $region83: #{tpu_custom_call.1} parent=81 // pred_check
          %p288 = pneg %p42
        $region84: #{tpu_custom_call.1} parent=81 // pred_check_branch
          %290 = sbr.rel (%p288) target = $region86
        $region85: #{tpu_custom_call.1} parent=81 // pred_region
          _
        $region86: #{tpu_custom_call.1} parent=81 // pred_fallthru
          _
        %s291 = sand.u32 %s29, 1
        %s292 = sand.u32 %s29, 1
        %s293 = smul.addr %s292, 16
        %s294 = scalar_lea.vmem [#allocation2], %s293
        %p295 = pneg %p42
        %p296 = pneg %p39
        %p297 = pneg %p63
        %p298 = pneg %p60
        %p299 = pneg %p84
        %p300 = pneg %p81
        %p301 = pneg %p105
        %p302 = pneg %p102
        %p303 = pneg %p126
        %p304 = pneg %p123
        %p305 = pneg %p147
        %p306 = pneg %p144
        %p307 = pneg %p168
        %p308 = pneg %p165
        %p309 = pneg %p194
        %p310 = pneg %p191
        %s311 = sand.u32 %s181, 1
        %s312 = scalar_lea.sflag [#allocation4], %s311
        %s313 = sand.u32 %s181, 1
        %s314 = smul.addr %s313, 8
        %s315 = scalar_lea.vmem [#allocation3], %s314
        %v316 = vld [vmem:[%s287] sm:$0xff]
        %v317 = vld [vmem:[%s287 + $0x8] sm:$0xff]
        %v318 = vld [vmem:[%s1] sm:$0xff]
        %v319 = vld [vmem:[%s1 + $0x8] sm:$0xff]
        %v320 = vld [vmem:[%s1 + $0x10] sm:$0xff]
        %v321 = vld [vmem:[%s1 + $0x18] sm:$0xff]
        %v322 = vld [vmem:[%s2] sm:$0xff]
        %v323 = vld [vmem:[%s2 + $0x8] sm:$0xff]
        %v324 = vld [vmem:[%s2 + $0x10] sm:$0xff]
        %v325 = vld [vmem:[%s2 + $0x18] sm:$0xff]
        %327 = vset.pattern.permute.xlu0 0
        %328 = vperm.xlu0 %327, %v322
        %v329 = vpop.permute.xlu0 %328
        %332 = vset.pattern.permute.xlu0 0
        %333 = vperm.xlu0 %332, %v323
        %v334 = vpop.permute.xlu0 %333
        %337 = vset.pattern.permute.xlu0 0
        %338 = vperm.xlu0 %337, %v324
        %v339 = vpop.permute.xlu0 %338
        %342 = vset.pattern.permute.xlu0 0
        %343 = vperm.xlu0 %342, %v325
        %v344 = vpop.permute.xlu0 %343
        %vm346 = vcmask 130048
        %v348 = vsel %vm346, %v318, 0
        %v351 = vsel %vm346, %v319, 0
        %v354 = vsel %vm346, %v320, 0
        %v357 = vsel %vm346, %v321, 0
        %359 = vmatpush.msra.mxu0 0.0
        %360 = vmatpush.msra.mxu0 0.0
        %361 = vmatpush.msra.mxu0 0.0
        %362 = vmatpush.msra.mxu0 0.0
        %363 = vmatpush.msra.mxu0 0.0
        %364 = vmatpush.msra.mxu0 0.0
        %365 = vmatpush.msra.mxu0 0.0
        %366 = vmatpush.msra.mxu0 0.0
        %367 = vmatpush.msra.mxu0 0.0
        %368 = vmatpush.msra.mxu0 0.0
        %369 = vmatpush.msra.mxu0 0.0
        %370 = vmatpush.msra.mxu0 0.0
        %371 = vmatpush.msra.mxu0 0.0
        %372 = vmatpush.msra.mxu0 0.0
        %373 = vmatpush.msra.mxu0 %v317
        %374 = vmatpush.msra.mxu0 %v316
        %375 = vmatmul.f32.gmra.mxu0 %v348
        %v376 = vpop.f32.mrf.mxu0
        %v377 = vadd.f32 %v329, %v376
        %378 = vmatmul.f32.gmra.mxu0 %v351
        %v379 = vpop.f32.mrf.mxu0
        %v380 = vadd.f32 %v334, %v379
        %381 = vmatmul.f32.gmra.mxu0 %v354
        %v382 = vpop.f32.mrf.mxu0
        %v383 = vadd.f32 %v339, %v382
        %384 = vmatmul.f32.gmra.mxu0 %v357
        %v385 = vpop.f32.mrf.mxu0
        %v386 = vadd.f32 %v344, %v385
        %387 = vdwg.mxu0
        %v388 = vmax.f32 %v377, 0.0
        %v389 = vmax.f32 %v380, 0.0
        %v390 = vmax.f32 %v383, 0.0
        %v391 = vmax.f32 %v386, 0.0
        %v392 = vld [vmem:[%s3] sm:$0xff]
        %v393 = vld [vmem:[%s3 + $0x8] sm:$0xff]
        %v394 = vld [vmem:[%s3 + $0x10] sm:$0xff]
        %v395 = vld [vmem:[%s3 + $0x18] sm:$0xff]
        %v396 = vld [vmem:[%s4] sm:$0xff]
        %v397 = vld [vmem:[%s4 + $0x8] sm:$0xff]
        %v398 = vld [vmem:[%s4 + $0x10] sm:$0xff]
        %v399 = vld [vmem:[%s4 + $0x18] sm:$0xff]
        %401 = vset.pattern.permute.xlu0 0
        %402 = vperm.xlu0 %401, %v396
        %v403 = vpop.permute.xlu0 %402
        %406 = vset.pattern.permute.xlu0 0
        %407 = vperm.xlu0 %406, %v397
        %v408 = vpop.permute.xlu0 %407
        %411 = vset.pattern.permute.xlu0 0
        %412 = vperm.xlu0 %411, %v398
        %v413 = vpop.permute.xlu0 %412
        %416 = vset.pattern.permute.xlu0 0
        %417 = vperm.xlu0 %416, %v399
        %v418 = vpop.permute.xlu0 %417
        %vm420 = vcmask 261120
        %v422 = vsel %vm420, %v392, 0
        %v425 = vsel %vm420, %v393, 0
        %v428 = vsel %vm420, %v394, 0
        %v431 = vsel %vm420, %v395, 0
        %433 = vmatpush.msra.mxu0 0.0
        %434 = vmatpush.msra.mxu0 0.0
        %435 = vmatpush.msra.mxu0 0.0
        %436 = vmatpush.msra.mxu0 0.0
        %437 = vmatpush.msra.mxu0 0.0
        %438 = vmatpush.msra.mxu0 0.0
        %439 = vmatpush.msra.mxu0 0.0
        %440 = vmatpush.msra.mxu0 0.0
        %441 = vmatpush.msra.mxu0 0.0
        %442 = vmatpush.msra.mxu0 0.0
        %443 = vmatpush.msra.mxu0 0.0
        %444 = vmatpush.msra.mxu0 0.0
        %445 = vmatpush.msra.mxu0 %v391
        %446 = vmatpush.msra.mxu0 %v390
        %447 = vmatpush.msra.mxu0 %v389
        %448 = vmatpush.msra.mxu0 %v388
        %449 = vmatmul.f32.gmra.mxu0 %v422
        %v450 = vpop.f32.mrf.mxu0
        %v451 = vadd.f32 %v403, %v450
        %452 = vmatmul.f32.gmra.mxu0 %v425
        %v453 = vpop.f32.mrf.mxu0
        %v454 = vadd.f32 %v408, %v453
        %455 = vmatmul.f32.gmra.mxu0 %v428
        %v456 = vpop.f32.mrf.mxu0
        %v457 = vadd.f32 %v413, %v456
        %458 = vmatmul.f32.gmra.mxu0 %v431
        %v459 = vpop.f32.mrf.mxu0
        %v460 = vadd.f32 %v418, %v459
        %461 = vdwg.mxu0
        %v462 = vmax.f32 %v451, 0.0
        %v463 = vmax.f32 %v454, 0.0
        %v464 = vmax.f32 %v457, 0.0
        %v465 = vmax.f32 %v460, 0.0
        %v466 = vld [vmem:[%s5] sm:$0xff]
        %v467 = vld [vmem:[%s6] sm:$0xff]
        %469 = vset.pattern.permute.xlu0 0
        %470 = vperm.xlu0 %469, %v467
        %v471 = vpop.permute.xlu0 %470
        %v474 = vsel %vm420, %v466, 0
        %476 = vmatpush.msra.mxu0 0.0
        %477 = vmatpush.msra.mxu0 0.0
        %478 = vmatpush.msra.mxu0 0.0
        %479 = vmatpush.msra.mxu0 0.0
        %480 = vmatpush.msra.mxu0 0.0
        %481 = vmatpush.msra.mxu0 0.0
        %482 = vmatpush.msra.mxu0 0.0
        %483 = vmatpush.msra.mxu0 0.0
        %484 = vmatpush.msra.mxu0 0.0
        %485 = vmatpush.msra.mxu0 0.0
        %486 = vmatpush.msra.mxu0 0.0
        %487 = vmatpush.msra.mxu0 0.0
        %488 = vmatpush.msra.mxu0 %v465
        %489 = vmatpush.msra.mxu0 %v464
        %490 = vmatpush.msra.mxu0 %v463
        %491 = vmatpush.msra.mxu0 %v462
        %492 = vmatmul.f32.gmra.mxu0 %v474
        %v493 = vpop.f32.mrf.mxu0
        %v494 = vadd.f32 %v471, %v493
        %495 = vdwg.mxu0
        %496 = vst [vmem:[%s315] sm:$0xff] %v494
        %s497 = sand.u32 %s181, 1
        %s498 = scalar_lea.sflag [#allocation4], %s497
        %s499 = sand.u32 %s181, 1
        %s500 = smul.addr %s499, 8
        %s501 = scalar_lea.vmem [#allocation3], %s500
        // Predicated region
        $region87: #{tpu_custom_call.1} parent=81 // pred_check
          %p502 = pneg %p191
        $region88: #{tpu_custom_call.1} parent=81 // pred_check_branch
          %504 = sbr.rel (%p502) target = $region90
        $region89: #{tpu_custom_call.1} parent=81 // pred_region
          %506 = vsyncadd %s498, 0
          %s507 = smul.addr %s21, 8
          %s508 = scalar_lea.hbm %s7, %s507
          %s510 = sshll.u32 %s501, 4
          %s511 = int_to_ptr.vmem [resolvable:$true] %s510
          %s512 = sshll.u32 %s508, 4
          %s513 = int_to_ptr.hbm [resolvable:$true] %s512
          %515 = dma.vmem_to_hbm [thread:$0]  %s511, 128, %s513, %s498
        $region90: #{tpu_custom_call.1} parent=81 // pred_fallthru
          _
      $region82: #{tpu_custom_call.1} parent=5 // pred_fallthru
        _
      %p516 = scmp.le.s32.totalorder 2, %s16
      // Predicated region
      $region91: #{tpu_custom_call.1} parent=5 // pred_check
        %p517 = pneg %p516
      $region92: #{tpu_custom_call.1} parent=5 // pred_check_branch
        %519 = sbr.rel (%p517) target = $region94
      $region93: #{tpu_custom_call.1} parent=5 // pred_region
        %s520 = ssub.s32 %s16, 2
        // Predicated region
        $region95: #{tpu_custom_call.1} parent=93 // pred_check
          %p521 = pneg %p197
        $region96: #{tpu_custom_call.1} parent=93 // pred_check_branch
          %523 = sbr.rel (%p521) target = $region98
        $region97: #{tpu_custom_call.1} parent=93 // pred_region
          %s524 = sand.u32 %s182, 1
          %s525 = scalar_lea.sflag [#allocation4], %s524
          %s526 = sand.u32 %s182, 1
          %s527 = smul.addr %s526, 8
          %s528 = scalar_lea.vmem [#allocation3], %s527
          %530 = dma.done %s525, 128
        $region98: #{tpu_custom_call.1} parent=93 // pred_fallthru
          _
      $region94: #{tpu_custom_call.1} parent=5 // pred_fallthru
        _
    $region6: #{tpu_custom_call.1} parent=1 // loop_footer
      %s20 = sadd.s32 1, %s16
    $region7: #{tpu_custom_call.1} parent=1 // loop_footer_branch
      %15 = sbr.rel target = $region3
    $region8: #{tpu_custom_call.1} parent=1 // loop_exit
      _
    %531 = vsyncpa [#allocation4], 1
    %s532 = scalar_lea.sflag [#allocation4], 1
    %533 = vsyncpa %s532, 1

</llo_original>
